<compile_context>
chip_gen: v5e
topology: v5e:2x2
jax: 0.10.0
libtpu: 0.0.40
codegen_flags: <defaults>
</compile_context>

<pallas_src>
import functools

import jax
import jax.numpy as jnp
from jax import lax
from jax.experimental import pallas as pl
from jax.experimental.pallas import tpu as pltpu

LOG2E = 1.4426950408889634  # log2(e): log2(softmax(x)) == log_softmax(x) * LOG2E
LANES = 128


def poe_head_kernel(d_ref, w_ref, out_ref, *, poe_mode, hidden, mlp_hid):
    d = d_ref[...]                                   # (bm, 128) packed per-row data
    w1 = w_ref[0]                                    # (128, 128) layer-1 | w3 | b1/b3 row
    w2 = w_ref[1]                                    # (128, 128) layer-2 | b2 row

    # --- one MXU pass: both models' layer-1 + bias_weight_linear (biases via const lane)
    h = jnp.dot(d, w1, preferred_element_type=jnp.float32)        # (bm, 128)
    a = jnp.tanh(h)                                  # garbage lanes hit all-zero W2 rows

    # --- second tiny MXU pass: both models' MLP->2 layer; b2 via stashed row ----------
    logits2 = jnp.dot(a, w2, preferred_element_type=jnp.float32) + w2[LANES - 1:, :]

    bl0 = logits2[:, 0:1]                            # bias-model logits
    bl1 = logits2[:, 1:2]
    rl0 = logits2[:, 2:3]                            # robust-model logits
    rl1 = logits2[:, 3:4]

    def log2_softmax2(x0, x1):
        # 2-class LSE identity: one exp + log1p instead of two exps + log.
        lse = jnp.maximum(x0, x1) + jnp.log1p(jnp.exp(-jnp.abs(x0 - x1)))
        return (x0 - lse) * LOG2E, (x1 - lse) * LOG2E

    blp0, blp1 = log2_softmax2(bl0, bl1)             # log2 p_bias
    rlp0, rlp1 = log2_softmax2(rl0, rl1)             # log2 p_robust

    # --- product-of-experts combine ----------------------------------------------------
    if poe_mode == "poe":
        s0, s1 = blp0, blp1
    else:                                            # 'poe_mixin' / 'poe_mixin_h'
        xw = h[:, 2 * mlp_hid:2 * mlp_hid + 1]       # bias_weight_linear pre-activation
        # nn.Softplus (beta=1, threshold=20)
        bw = jnp.where(xw > 20.0, xw, jnp.log1p(jnp.exp(jnp.minimum(xw, 20.0))))
        s0, s1 = bw * blp0, bw * blp1
    out0 = rlp0 + s0                                 # combined logit, class 0
    out1 = rlp1 + s1                                 # combined logit, class 1

    # --- per-block CrossEntropy partial sums (mean finished in the wrapper) ------------
    lab = d[:, 2 * hidden:2 * hidden + 1]            # labels as f32 {0,1}
    msk = d[:, 2 * hidden + 1:2 * hidden + 2]        # valid-row mask
    lse2 = jnp.maximum(out0, out1) + jnp.log1p(jnp.exp(-jnp.abs(out0 - out1)))
    nll = -((1.0 - lab) * (out0 - lse2) + lab * (out1 - lse2))
    nll_sum = jnp.sum(nll * msk)
    msk_sum = jnp.sum(msk)

    if poe_mode == "poe_mixin_h":
        slse = jnp.maximum(s0, s1) + jnp.log1p(jnp.exp(-jnp.abs(s0 - s1)))
        slp0 = s0 - slse
        slp1 = s1 - slse
        ent = -(jnp.exp(slp0) * slp0 + jnp.exp(slp1) * slp1) * LOG2E
        ent_sum = jnp.sum(ent * msk)
    else:
        ent_sum = 0.0

    # --- lane-dense output: logits in lanes 0..1, block partial sums in lanes 2..4 -----
    lane = lax.broadcasted_iota(jnp.int32, out_ref.shape, 1)
    out_ref[...] = jnp.where(lane == 0, out0,
                   jnp.where(lane == 1, out1,
                   jnp.where(lane == 2, nll_sum,
                   jnp.where(lane == 3, msk_sum,
                   jnp.where(lane == 4, ent_sum, 0.0)))))


def pack_data(bias_vec_p, rob_vec_p, labels_p, mask_p, hidden):
    """Build the lane-stacked (Np,128) data slab with a single concatenate."""
    assert 2 * hidden + 3 <= LANES
    np_rows = bias_vec_p.shape[0]
    zeros = jnp.zeros((np_rows, LANES - 2 * hidden - 3), jnp.float32)
    ones = jnp.ones((np_rows, 1), jnp.float32)       # constant lane -> layer-1 biases
    return jnp.concatenate(
        [bias_vec_p, rob_vec_p,
         labels_p.astype(jnp.float32)[:, None], mask_p[:, None],
         zeros, ones], axis=-1)


def pack_params(params, hidden, mlp_hid):
    """Pack all head parameters into one (2,128,128) weight slab.

    Computed ONCE per parameter set (cache per optimizer step); scatter cost is
    amortized away, unlike the per-call data slab.
    """
    assert 2 * hidden + 3 <= LANES and 2 * mlp_hid + 1 <= LANES - 1
    # W1: first matmul weight. Rows 0:H bias_w1 (lanes 0:mlp) + w3 (lane 2mlp);
    # rows H:2H rob_w1 (lanes mlp:2mlp); row 127 = [bias_b1 | rob_b1 | b3]
    # (multiplied by the constant-1 lane of D). Rows 2H, 2H+1 (label/mask lanes of D)
    # stay zero so they contribute nothing.
    w1 = jnp.zeros((LANES, LANES), jnp.float32)
    w1 = w1.at[:hidden, 0:mlp_hid].set(params["bias_w1"])
    w1 = w1.at[hidden:2 * hidden, mlp_hid:2 * mlp_hid].set(params["rob_w1"])
    w1 = w1.at[:hidden, 2 * mlp_hid:2 * mlp_hid + 1].set(params["w3"])
    w1 = w1.at[LANES - 1, 0:mlp_hid].set(params["bias_b1"].reshape(-1))
    w1 = w1.at[LANES - 1, mlp_hid:2 * mlp_hid].set(params["rob_b1"].reshape(-1))
    w1 = w1.at[LANES - 1, 2 * mlp_hid].set(params["b3"].reshape(-1)[0])
    # W2: second matmul weight. Rows 0:mlp bias_w2 -> lanes 0:2, rows mlp:2mlp rob_w2
    # -> lanes 2:4; row 127 stashes [bias_b2 | rob_b2] (added explicitly in-kernel;
    # a's lane 127 is tanh(0)=0 so the stash row never reaches the matmul result).
    w2 = jnp.zeros((LANES, LANES), jnp.float32)
    w2 = w2.at[0:mlp_hid, 0:2].set(params["bias_w2"])
    w2 = w2.at[mlp_hid:2 * mlp_hid, 2:4].set(params["rob_w2"])
    w2 = w2.at[LANES - 1, 0:2].set(params["bias_b2"].reshape(-1))
    w2 = w2.at[LANES - 1, 2:4].set(params["rob_b2"].reshape(-1))
    return jnp.stack([w1, w2], axis=0)


@functools.partial(jax.jit, static_argnames=("poe_mode", "entropy_weight",
                                             "hidden", "mlp_hid", "block_rows"))
def poe_head(bias_vec_p, rob_vec_p, w_packed, labels_p, mask_p, *,
             poe_mode, entropy_weight, hidden, mlp_hid, block_rows=None):
    """PoeClassifier head: 2 input DMAs per block, 1 lane-dense output slab."""
    np_rows = bias_vec_p.shape[0]
    if block_rows is None:
        block_rows = np_rows
    assert np_rows % block_rows == 0
    assert block_rows % 8 == 0 or block_rows == np_rows

    d = pack_data(bias_vec_p, rob_vec_p, labels_p, mask_p, hidden)
    kernel = functools.partial(poe_head_kernel, poe_mode=poe_mode,
                               hidden=hidden, mlp_hid=mlp_hid)
    out = pl.pallas_call(
        kernel,
        out_shape=jax.ShapeDtypeStruct((np_rows, LANES), jnp.float32),
        grid=(np_rows // block_rows,),
        in_specs=[pl.BlockSpec((block_rows, LANES), lambda i: (i, 0)),
                  pl.BlockSpec((2, LANES, LANES), lambda i: (0, 0, 0))],
        out_specs=pl.BlockSpec((block_rows, LANES), lambda i: (i, 0)),
        compiler_params=pltpu.CompilerParams(dimension_semantics=("parallel",)),
    )(d, w_packed)

    logits = out[:, :2]
    # Each row of a block carries the same per-block partial sum -> sum/block_rows
    # recovers the sum over blocks without strided gathers.
    nll_total = jnp.sum(out[:, 2]) * (1.0 / block_rows)
    msk_total = jnp.sum(out[:, 3]) * (1.0 / block_rows)
    ent_total = jnp.sum(out[:, 4]) * (1.0 / block_rows)
    inv_denom = 1.0 / jnp.maximum(msk_total, 1.0)    # computed once, reused; NaN-safe
    loss = nll_total * inv_denom
    if poe_mode == "poe_mixin_h":
        loss = loss + entropy_weight * ent_total * inv_denom
    return logits, loss


def reference(bias_vec, rob_vec, params, labels, mode, entropy_weight):
    """Pure-JAX mirror of the PyTorch head (correctness check)."""
    bias_h = jnp.tanh(bias_vec @ params["bias_w1"] + params["bias_b1"])
    bias_logits = bias_h @ params["bias_w2"] + params["bias_b2"]
    rob_h = jnp.tanh(rob_vec @ params["rob_w1"] + params["rob_b1"])
    rob_logits = rob_h @ params["rob_w2"] + params["rob_b2"]
    bias_prob = jax.nn.softmax(bias_logits, axis=-1)
    rob_prob = jax.nn.softmax(rob_logits, axis=-1)
    if mode == "poe":
        scaled = jnp.log2(bias_prob)
        logits = jnp.log2(rob_prob) + scaled
    else:
        xw = bias_vec @ params["w3"] + params["b3"]
        w = jnp.where(xw > 20.0, xw, jnp.log1p(jnp.exp(jnp.minimum(xw, 20.0))))
        scaled = w * jnp.log2(bias_prob)
        logits = jnp.log2(rob_prob) + scaled
    logp = jax.nn.log_softmax(logits, axis=-1)
    nll = -jnp.take_along_axis(logp, labels[:, None], axis=-1)[:, 0]
    loss = jnp.mean(nll)
    if mode == "poe_mixin_h":
        prob = jax.nn.softmax(scaled, axis=-1)
        ent = jnp.sum(-prob * (jax.nn.log_softmax(scaled, axis=-1) * LOG2E), axis=-1)
        loss = loss + entropy_weight * jnp.mean(ent)
    return logits, loss


if __name__ == "__main__":
    key = jax.random.PRNGKey(0)
    B, S, H, MLP, VOCAB = 2, 16, 32, 16, 50
    NUM_LABELS = 2
    ks = jax.random.split(key, 12)

    # TODO(synk): the pretrained BERT/RoBERTa transformer encoders have no clean small
    # Pallas equivalent here; they are replaced by deterministic embedding-table encoder
    # stubs producing (B, S, H) hidden states.
    bias_emb = jax.random.normal(ks[0], (VOCAB, H), jnp.float32) * 0.5
    rob_emb = jax.random.normal(ks[1], (VOCAB, H), jnp.float32) * 0.5

    # Head parameters (nn.Linear weights stored already transposed: (in, out)).
    params = {
        "bias_w1": jax.random.normal(ks[2], (H, MLP), jnp.float32) * 0.1,
        "bias_b1": jax.random.normal(ks[3], (1, MLP), jnp.float32) * 0.1,
        "bias_w2": jax.random.normal(ks[4], (MLP, NUM_LABELS), jnp.float32) * 0.1,
        "bias_b2": jax.random.normal(ks[5], (1, NUM_LABELS), jnp.float32) * 0.1,
        "rob_w1": jax.random.normal(ks[6], (H, MLP), jnp.float32) * 0.1,
        "rob_b1": jax.random.normal(ks[7], (1, MLP), jnp.float32) * 0.1,
        "rob_w2": jax.random.normal(ks[8], (MLP, NUM_LABELS), jnp.float32) * 0.1,
        "rob_b2": jax.random.normal(ks[9], (1, NUM_LABELS), jnp.float32) * 0.1,
        "w3": jax.random.normal(ks[10], (H, 1), jnp.float32) * 0.1,   # bias_weight_linear
        "b3": jnp.zeros((1, 1), jnp.float32),
    }

    input_ids = jax.random.randint(ks[11], (B, S), 0, VOCAB)
    attention_mask = jnp.ones((B, S), jnp.int32)       # full attention (stub ignores it)
    token_type_ids = jnp.zeros((B, S), jnp.int32)      # unused by RoBERTa-style head
    lengths = [3, 2]
    offsets = jnp.array([1, 4, 7, 2, 5], jnp.int32)
    batch_ids = jnp.array([0, 0, 0, 1, 1], jnp.int32)  # expansion of the loop over lengths
    N = int(sum(lengths))
    labels = jnp.array([0, 1, 1, 0, 1], jnp.int32)

    # Encoder forward (glue): (B, S, H) hidden states per model.
    bias_seq = bias_emb[input_ids]
    rob_seq = rob_emb[input_ids]
    # TODO(synk): nn.Dropout treated as identity (deterministic forward).

    # TODO(synk): the (batch_ids, offsets) row gather stays in XLA glue at this toy size;
    # at production H/N it should move in-kernel via scalar-prefetch-driven DMA (pl.ANY).
    bias_vec = bias_seq[batch_ids, offsets]   # (N, H)
    rob_vec = rob_seq[batch_ids, offsets]     # (N, H)

    # Pad N -> Np (multiple of 8 sublanes); padded rows are masked out of the loss.
    Np = 8
    pad = Np - N
    bias_vec_p = jnp.pad(bias_vec, ((0, pad), (0, 0)))
    rob_vec_p = jnp.pad(rob_vec, ((0, pad), (0, 0)))
    labels_p = jnp.pad(labels, (0, pad)).astype(jnp.int32)
    mask_p = jnp.pad(jnp.ones((N,), jnp.float32), (0, pad))

    # Weight slab packed ONCE per parameter set (batch-independent) and reused.
    w_packed = jax.block_until_ready(pack_params(params, H, MLP))

    for mode in ("poe", "poe_mixin", "poe_mixin_h"):
        logits_p, loss = poe_head(bias_vec_p, rob_vec_p, w_packed, labels_p, mask_p,
                                  poe_mode=mode, entropy_weight=0.1,
                                  hidden=H, mlp_hid=MLP)
        logits = logits_p[:N]
        jax.block_until_ready((logits, loss))
        ref_logits, ref_loss = reference(bias_vec, rob_vec, params, labels, mode, 0.1)
        assert jnp.allclose(logits, ref_logits, atol=1e-4, rtol=1e-4), mode
        assert jnp.allclose(loss, ref_loss, atol=1e-4, rtol=1e-4), mode

    print("KERNEL_OK")
</pallas_src>

<mosaic_0001>
module attributes {stable_mosaic.version = 11 : i64} {
  func.func @poe_head_kernel(%arg0: i32, %arg1: memref<8x128xf32, #tpu.memory_space<vmem>>, %arg2: memref<2x128x128xf32, #tpu.memory_space<vmem>>, %arg3: memref<8x128xf32, #tpu.memory_space<vmem>>) attributes {dimension_semantics = [#tpu.dimension_semantics<parallel>], iteration_bounds = array<i64: 1>, scalar_prefetch = 0 : i64, scratch_operands = 0 : i64, tpu.core_type = #tpu.core_type<tc>, window_params = [{transform_indices = @transform_0, window_bounds = array<i64: 8, 128>}, {pipeline_mode = #tpu.pipeline_mode<synchronous>, transform_indices = @transform_1, window_bounds = array<i64: 2, 128, 128>}, {transform_indices = @transform_2, window_bounds = array<i64: 8, 128>}]} {
    %c0 = arith.constant 0 : index
    %c0_0 = arith.constant 0 : index
    %0 = vector.load %arg1[%c0, %c0_0] : memref<8x128xf32, #tpu.memory_space<vmem>>, vector<8x128xf32>
    %c0_1 = arith.constant 0 : index
    %c0_2 = arith.constant 0 : index
    %c0_3 = arith.constant 0 : index
    %1 = vector.load %arg2[%c0_1, %c0_2, %c0_3] : memref<2x128x128xf32, #tpu.memory_space<vmem>>, vector<1x128x128xf32>
    %2 = vector.shape_cast %1 : vector<1x128x128xf32> to vector<128x128xf32>
    %c1 = arith.constant 1 : index
    %c0_4 = arith.constant 0 : index
    %c0_5 = arith.constant 0 : index
    %3 = vector.load %arg2[%c1, %c0_4, %c0_5] : memref<2x128x128xf32, #tpu.memory_space<vmem>>, vector<1x128x128xf32>
    %4 = vector.shape_cast %3 : vector<1x128x128xf32> to vector<128x128xf32>
    %cst = arith.constant dense<0.000000e+00> : vector<8x128xf32>
    %5 = tpu.matmul %0, %2, %cst {dimension_numbers = #tpu.dot_dimension_numbers<[1], [0], [0], [1], [0, 0, 1, 1], [], []>} : vector<8x128xf32>, vector<128x128xf32>, vector<8x128xf32> -> vector<8x128xf32>
    %6 = math.tanh %5 : vector<8x128xf32>
    %cst_6 = arith.constant dense<0.000000e+00> : vector<8x128xf32>
    %7 = tpu.matmul %6, %4, %cst_6 {dimension_numbers = #tpu.dot_dimension_numbers<[1], [0], [0], [1], [0, 0, 1, 1], [], []>} : vector<8x128xf32>, vector<128x128xf32>, vector<8x128xf32> -> vector<8x128xf32>
    %8 = vector.extract_strided_slice %4 {offsets = [127, 0], sizes = [1, 128], strides = [1, 1]} : vector<128x128xf32> to vector<1x128xf32>
    %9 = vector.broadcast %8 : vector<1x128xf32> to vector<8x128xf32>
    %10 = arith.addf %7, %9 : vector<8x128xf32>
    %11 = vector.extract_strided_slice %10 {offsets = [0, 0], sizes = [8, 1], strides = [1, 1]} : vector<8x128xf32> to vector<8x1xf32>
    %12 = vector.extract_strided_slice %10 {offsets = [0, 1], sizes = [8, 1], strides = [1, 1]} : vector<8x128xf32> to vector<8x1xf32>
    %13 = vector.extract_strided_slice %10 {offsets = [0, 2], sizes = [8, 1], strides = [1, 1]} : vector<8x128xf32> to vector<8x1xf32>
    %14 = vector.extract_strided_slice %10 {offsets = [0, 3], sizes = [8, 1], strides = [1, 1]} : vector<8x128xf32> to vector<8x1xf32>
    %15 = arith.maximumf %11, %12 : vector<8x1xf32>
    %16 = arith.subf %11, %12 : vector<8x1xf32>
    %17 = math.absf %16 : vector<8x1xf32>
    %cst_7 = arith.constant 0.000000e+00 : f32
    %18 = vector.broadcast %cst_7 : f32 to vector<8x1xf32>
    %19 = arith.subf %18, %17 : vector<8x1xf32>
    %20 = math.exp %19 : vector<8x1xf32>
    %21 = math.log1p %20 : vector<8x1xf32>
    %22 = arith.addf %15, %21 : vector<8x1xf32>
    %23 = arith.subf %11, %22 : vector<8x1xf32>
    %cst_8 = arith.constant 1.44269502 : f32
    %24 = vector.broadcast %cst_8 : f32 to vector<8x1xf32>
    %25 = arith.mulf %23, %24 : vector<8x1xf32>
    %26 = arith.subf %12, %22 : vector<8x1xf32>
    %cst_9 = arith.constant 1.44269502 : f32
    %27 = vector.broadcast %cst_9 : f32 to vector<8x1xf32>
    %28 = arith.mulf %26, %27 : vector<8x1xf32>
    %29 = arith.maximumf %13, %14 : vector<8x1xf32>
    %30 = arith.subf %13, %14 : vector<8x1xf32>
    %31 = math.absf %30 : vector<8x1xf32>
    %cst_10 = arith.constant 0.000000e+00 : f32
    %32 = vector.broadcast %cst_10 : f32 to vector<8x1xf32>
    %33 = arith.subf %32, %31 : vector<8x1xf32>
    %34 = math.exp %33 : vector<8x1xf32>
    %35 = math.log1p %34 : vector<8x1xf32>
    %36 = arith.addf %29, %35 : vector<8x1xf32>
    %37 = arith.subf %13, %36 : vector<8x1xf32>
    %cst_11 = arith.constant 1.44269502 : f32
    %38 = vector.broadcast %cst_11 : f32 to vector<8x1xf32>
    %39 = arith.mulf %37, %38 : vector<8x1xf32>
    %40 = arith.subf %14, %36 : vector<8x1xf32>
    %cst_12 = arith.constant 1.44269502 : f32
    %41 = vector.broadcast %cst_12 : f32 to vector<8x1xf32>
    %42 = arith.mulf %40, %41 : vector<8x1xf32>
    %43 = arith.addf %39, %25 : vector<8x1xf32>
    %44 = arith.addf %42, %28 : vector<8x1xf32>
    %45 = vector.extract_strided_slice %0 {offsets = [0, 64], sizes = [8, 1], strides = [1, 1]} : vector<8x128xf32> to vector<8x1xf32>
    %46 = vector.extract_strided_slice %0 {offsets = [0, 65], sizes = [8, 1], strides = [1, 1]} : vector<8x128xf32> to vector<8x1xf32>
    %47 = arith.maximumf %43, %44 : vector<8x1xf32>
    %48 = arith.subf %43, %44 : vector<8x1xf32>
    %49 = math.absf %48 : vector<8x1xf32>
    %cst_13 = arith.constant 0.000000e+00 : f32
    %50 = vector.broadcast %cst_13 : f32 to vector<8x1xf32>
    %51 = arith.subf %50, %49 : vector<8x1xf32>
    %52 = math.exp %51 : vector<8x1xf32>
    %53 = math.log1p %52 : vector<8x1xf32>
    %54 = arith.addf %47, %53 : vector<8x1xf32>
    %cst_14 = arith.constant 1.000000e+00 : f32
    %55 = vector.broadcast %cst_14 : f32 to vector<8x1xf32>
    %56 = arith.subf %55, %45 : vector<8x1xf32>
    %57 = arith.subf %43, %54 : vector<8x1xf32>
    %58 = arith.mulf %56, %57 : vector<8x1xf32>
    %59 = arith.subf %44, %54 : vector<8x1xf32>
    %60 = arith.mulf %45, %59 : vector<8x1xf32>
    %61 = arith.addf %58, %60 : vector<8x1xf32>
    %cst_15 = arith.constant 0.000000e+00 : f32
    %62 = vector.broadcast %cst_15 : f32 to vector<8x1xf32>
    %63 = arith.subf %62, %61 : vector<8x1xf32>
    %64 = arith.mulf %63, %46 : vector<8x1xf32>
    %65 = vector.shape_cast %64 : vector<8x1xf32> to vector<1x8x1xf32>
    %cst_16 = arith.constant dense<0.000000e+00> : vector<1xf32>
    %66 = vector.multi_reduction <add>, %65, %cst_16 [1, 2] : vector<1x8x1xf32> to vector<1xf32>
    %67 = vector.shape_cast %66 : vector<1xf32> to vector<1x1x1xf32>
    %68 = vector.extract %67[0, 0, 0] : f32 from vector<1x1x1xf32>
    %69 = vector.shape_cast %46 : vector<8x1xf32> to vector<1x8x1xf32>
    %cst_17 = arith.constant dense<0.000000e+00> : vector<1xf32>
    %70 = vector.multi_reduction <add>, %69, %cst_17 [1, 2] : vector<1x8x1xf32> to vector<1xf32>
    %71 = vector.shape_cast %70 : vector<1xf32> to vector<1x1x1xf32>
    %72 = vector.extract %71[0, 0, 0] : f32 from vector<1x1x1xf32>
    %73 = tpu.iota {dimensions = array<i32: 1>} : vector<8x128xi32>
    %c0_i32 = arith.constant 0 : i32
    %74 = vector.broadcast %c0_i32 : i32 to vector<8x128xi32>
    %75 = arith.cmpi eq, %73, %74 : vector<8x128xi32>
    %c1_i32 = arith.constant 1 : i32
    %76 = vector.broadcast %c1_i32 : i32 to vector<8x128xi32>
    %77 = arith.cmpi eq, %73, %76 : vector<8x128xi32>
    %c2_i32 = arith.constant 2 : i32
    %78 = vector.broadcast %c2_i32 : i32 to vector<8x128xi32>
    %79 = arith.cmpi eq, %73, %78 : vector<8x128xi32>
    %c3_i32 = arith.constant 3 : i32
    %80 = vector.broadcast %c3_i32 : i32 to vector<8x128xi32>
    %81 = arith.cmpi eq, %73, %80 : vector<8x128xi32>
    %c4_i32 = arith.constant 4 : i32
    %82 = vector.broadcast %c4_i32 : i32 to vector<8x128xi32>
    %83 = arith.cmpi eq, %73, %82 : vector<8x128xi32>
    %cst_18 = arith.constant 0.000000e+00 : f32
    %cst_19 = arith.constant 0.000000e+00 : f32
    %84 = vector.broadcast %cst_18 : f32 to vector<8x128xf32>
    %85 = vector.broadcast %cst_19 : f32 to vector<8x128xf32>
    %86 = arith.select %83, %84, %85 : vector<8x128xi1>, vector<8x128xf32>
    %87 = vector.broadcast %72 : f32 to vector<8x128xf32>
    %88 = arith.select %81, %87, %86 : vector<8x128xi1>, vector<8x128xf32>
    %89 = vector.broadcast %68 : f32 to vector<8x128xf32>
    %90 = arith.select %79, %89, %88 : vector<8x128xi1>, vector<8x128xf32>
    %91 = vector.shape_cast %44 : vector<8x1xf32> to vector<8x1xf32>
    %92 = vector.broadcast %91 : vector<8x1xf32> to vector<8x128xf32>
    %93 = arith.select %77, %92, %90 : vector<8x128xi1>, vector<8x128xf32>
    %94 = vector.shape_cast %43 : vector<8x1xf32> to vector<8x1xf32>
    %95 = vector.broadcast %94 : vector<8x1xf32> to vector<8x128xf32>
    %96 = arith.select %75, %95, %93 : vector<8x128xi1>, vector<8x128xf32>
    %c0_20 = arith.constant 0 : index
    %c0_21 = arith.constant 0 : index
    %97 = vector.load %arg3[%c0_20, %c0_21] : memref<8x128xf32, #tpu.memory_space<vmem>>, vector<8x128xf32>
    tpu.vector_store %arg3[%c0_20, %c0_21], %96 {strides = array<i32>} : memref<8x128xf32, #tpu.memory_space<vmem>>, vector<8x128xf32>,
    return
  }
  func.func @transform_0(%arg0: i32) -> (i32, i32) {
    %c0_i32 = arith.constant 0 : i32
    %c0_i32_0 = arith.constant 0 : i32
    return %arg0, %c0_i32 : i32, i32
  }
  func.func @transform_1(%arg0: i32) -> (i32, i32, i32) {
    %c0_i32 = arith.constant 0 : i32
    %c0_i32_0 = arith.constant 0 : i32
    %c0_i32_1 = arith.constant 0 : i32
    %c0_i32_2 = arith.constant 0 : i32
    return %c0_i32, %c0_i32_0, %c0_i32_1 : i32, i32, i32
  }
  func.func @transform_2(%arg0: i32) -> (i32, i32) {
    %c0_i32 = arith.constant 0 : i32
    %c0_i32_0 = arith.constant 0 : i32
    return %arg0, %c0_i32 : i32, i32
  }
}

</mosaic_0001>

<llo_original>
// kernel: poe_head.1
$region0: #{poe_head.1}
  #allocation0 [shape = 'u32[]', space=smem, size = 0x4, offset = 0x4, fixed_abs, tag = 'smem constant byte address 0x4 - core index']
  #allocation1 [shape = 'u32[72,128]{1,0:T(1,128)}', space=vmem, size = 0x9000, scoped, tag = 'internal scratch']
  %s0 = inlined_call_operand.vmem [shape: f32[8,128], index: 0, kind: input, shape index: {}]
  %s1 = inlined_call_operand.hbm [shape: f32[2,128,128], index: 1, kind: input, shape index: {}]
  %s2 = inlined_call_operand.vmem [shape: f32[8,128], index: 2, kind: output, shape index: {}]
  %s3 = sld [smem:[#allocation0]]
  $region22: #{poe_head.1} parent=0
    _
  %s5 = ssub.s32 1, %s3
  %s6 = scalar_select 0, %s5, %s3
  $region1: #{poe_head.1} parent=0
    #allocation2 [shape = 'u8[131072]{0}', space=vmem, size = 0x20000, scoped, tag = 'input window, operand 1, single buffered']
    #allocation3 [shape = 's32[1]{0}', space=sflag, size = 0x4, scoped, tag = 'scoped memory for poe_head.1']
    %7 = vsyncpa [#allocation3], 0
    // Predicated region
    $region2: #{poe_head.1} parent=1 // pred_check
      _
    $region3: #{poe_head.1} parent=1 // pred_check_branch
      %9 = sbr.rel (0) target = $region5
    $region4: #{poe_head.1} parent=1 // pred_region
      _
    $region5: #{poe_head.1} parent=1 // pred_fallthru
      _
    // Predicated region
    $region6: #{poe_head.1} parent=1 // pred_check
      _
    $region7: #{poe_head.1} parent=1 // pred_check_branch
      %11 = sbr.rel (0) target = $region9
    $region8: #{poe_head.1} parent=1 // pred_region
      %13 = vsyncadd [#allocation3], 0
      %s14 = sshll.u32 %s1, 4
      %s15 = int_to_ptr.hbm [resolvable:$true] %s14
      %s16 = sshll.u32 [#allocation2], 4
      %s17 = int_to_ptr.vmem [resolvable:$true] %s16
      %22 = dma.hbm_to_vmem [thread:$0]  %s15, 4096, %s17, [#allocation3], 128, 128, 8
    $region9: #{poe_head.1} parent=1 // pred_fallthru
      _
    // Predicated region
    $region10: #{poe_head.1} parent=1 // pred_check
      _
    $region11: #{poe_head.1} parent=1 // pred_check_branch
      %24 = sbr.rel (0) target = $region13
    $region12: #{poe_head.1} parent=1 // pred_region
      %26 = dma.done [#allocation3], 4096
    $region13: #{poe_head.1} parent=1 // pred_fallthru
      _
    %v27 = vld [vmem:[%s0] sm:$0xff]
    %v28 = vld [vmem:[#allocation2] sm:$0xff]
    %v29 = vld [vmem:[#allocation2 + $0x8] sm:$0xff]
    %v30 = vld [vmem:[#allocation2 + $0x10] sm:$0xff]
    %v31 = vld [vmem:[#allocation2 + $0x18] sm:$0xff]
    %v32 = vld [vmem:[#allocation2 + $0x20] sm:$0xff]
    %v33 = vld [vmem:[#allocation2 + $0x28] sm:$0xff]
    %v34 = vld [vmem:[#allocation2 + $0x30] sm:$0xff]
    %v35 = vld [vmem:[#allocation2 + $0x38] sm:$0xff]
    %v36 = vld [vmem:[#allocation2 + $0x40] sm:$0xff]
    %v37 = vld [vmem:[#allocation2 + $0x48] sm:$0xff]
    %v38 = vld [vmem:[#allocation2 + $0x50] sm:$0xff]
    %v39 = vld [vmem:[#allocation2 + $0x58] sm:$0xff]
    %v40 = vld [vmem:[#allocation2 + $0x60] sm:$0xff]
    %v41 = vld [vmem:[#allocation2 + $0x68] sm:$0xff]
    %v42 = vld [vmem:[#allocation2 + $0x70] sm:$0xff]
    %v43 = vld [vmem:[#allocation2 + $0x78] sm:$0xff]
    %s44 = scalar_lea.vmem [#allocation2], 128
    %v45 = vld [vmem:[%s44] sm:$0xff]
    %v46 = vld [vmem:[%s44 + $0x8] sm:$0xff]
    %v47 = vld [vmem:[%s44 + $0x10] sm:$0xff]
    %v48 = vld [vmem:[%s44 + $0x18] sm:$0xff]
    %v49 = vld [vmem:[%s44 + $0x20] sm:$0xff]
    %v50 = vld [vmem:[%s44 + $0x28] sm:$0xff]
    %v51 = vld [vmem:[%s44 + $0x30] sm:$0xff]
    %v52 = vld [vmem:[%s44 + $0x38] sm:$0xff]
    %v53 = vld [vmem:[%s44 + $0x40] sm:$0xff]
    %v54 = vld [vmem:[%s44 + $0x48] sm:$0xff]
    %v55 = vld [vmem:[%s44 + $0x50] sm:$0xff]
    %v56 = vld [vmem:[%s44 + $0x58] sm:$0xff]
    %v57 = vld [vmem:[%s44 + $0x60] sm:$0xff]
    %v58 = vld [vmem:[%s44 + $0x68] sm:$0xff]
    %v59 = vld [vmem:[%s44 + $0x70] sm:$0xff]
    %v60 = vld [vmem:[%s44 + $0x78] sm:$0xff]
    %61 = vmatpush.msra.mxu0 %v43
    %62 = vmatpush.msra.mxu0 %v42
    %63 = vmatpush.msra.mxu0 %v41
    %64 = vmatpush.msra.mxu0 %v40
    %65 = vmatpush.msra.mxu0 %v39
    %66 = vmatpush.msra.mxu0 %v38
    %67 = vmatpush.msra.mxu0 %v37
    %68 = vmatpush.msra.mxu0 %v36
    %69 = vmatpush.msra.mxu0 %v35
    %70 = vmatpush.msra.mxu0 %v34
    %71 = vmatpush.msra.mxu0 %v33
    %72 = vmatpush.msra.mxu0 %v32
    %73 = vmatpush.msra.mxu0 %v31
    %74 = vmatpush.msra.mxu0 %v30
    %75 = vmatpush.msra.mxu0 %v29
    %76 = vmatpush.msra.mxu0 %v28
    %77 = vmatmul.f32.gmra.mxu0 %v27
    %v78 = vpop.f32.mrf.mxu0
    %v79 = vadd.f32 0.0, %v78
    %80 = vdwg.mxu0
    %v81 = vtanh.pop %v79
    %v82 = vperm.slane %v60, 7
    %83 = vmatpush.msra.mxu0 %v60
    %84 = vmatpush.msra.mxu0 %v59
    %85 = vmatpush.msra.mxu0 %v58
    %86 = vmatpush.msra.mxu0 %v57
    %87 = vmatpush.msra.mxu0 %v56
    %88 = vmatpush.msra.mxu0 %v55
    %89 = vmatpush.msra.mxu0 %v54
    %90 = vmatpush.msra.mxu0 %v53
    %91 = vmatpush.msra.mxu0 %v52
    %92 = vmatpush.msra.mxu0 %v51
    %93 = vmatpush.msra.mxu0 %v50
    %94 = vmatpush.msra.mxu0 %v49
    %95 = vmatpush.msra.mxu0 %v48
    %96 = vmatpush.msra.mxu0 %v47
    %97 = vmatpush.msra.mxu0 %v46
    %98 = vmatpush.msra.mxu0 %v45
    %99 = vmatmul.f32.gmra.mxu0 %v81
    %v100 = vpop.f32.mrf.mxu0
    %v101 = vadd.f32 %v82, %v100
    %102 = vdwg.mxu0
    %104 = vrot.lane.b32.xlu0 %v101, 127
    %v105 = vpop.permute.xlu0 %104
    %v107 = vmax.f32 %v101, %v105
    %v108 = vsub.f32 %v101, %v105
    %v109 = vand.u32 2147483647, %v108
    %v110 = vsub.f32 0.0, %v109
    %v111 = vmul.f32 %v110, 1.442695
    %v112 = vpow.pop %v111
    %v113 = vadd.f32 %v112, 1.0
    %v114 = vlog2.pop %v113
    %v115 = vmul.f32 %v114, 0.6931472
    %v116 = vmul.f32 -0.5, %v112
    %v117 = vadd.f32 %v116, 1.0
    %v118 = vmul.f32 %v117, %v112
    %v119 = vand.u32 2147483647, %v112
    %vm120 = vcmp.lt.f32.partialorder %v119, 0.0004427343
    %v121 = vsel %vm120, %v118, %v115
    %v122 = vadd.f32 %v107, %v121
    %v123 = vsub.f32 %v101, %v122
    %v124 = vmul.f32 %v123, 1.442695
    %126 = vrot.lane.b32.xlu0 %v122, 1
    %v127 = vpop.permute.xlu0 %126
    %v129 = vsub.f32 %v101, %v127
    %v130 = vmul.f32 %v129, 1.442695
    %132 = vrot.lane.b32.xlu0 %v124, 2
    %v133 = vpop.permute.xlu0 %132
    %v135 = vadd.f32 %v124, %v133
    %137 = vrot.lane.b32.xlu0 %v130, 2
    %v138 = vpop.permute.xlu0 %137
    %v140 = vadd.f32 %v130, %v138
    %142 = vrot.lane.b32.xlu0 %v140, 127
    %v143 = vpop.permute.xlu0 %142
    %v145 = vmax.f32 %v135, %v143
    %v146 = vsub.f32 %v135, %v143
    %v147 = vand.u32 2147483647, %v146
    %v148 = vsub.f32 0.0, %v147
    %v149 = vmul.f32 %v148, 1.442695
    %v150 = vpow.pop %v149
    %v151 = vadd.f32 %v150, 1.0
    %v152 = vlog2.pop %v151
    %v153 = vmul.f32 %v152, 0.6931472
    %v154 = vmul.f32 -0.5, %v150
    %v155 = vadd.f32 %v154, 1.0
    %v156 = vmul.f32 %v155, %v150
    %v157 = vand.u32 2147483647, %v150
    %vm158 = vcmp.lt.f32.partialorder %v157, 0.0004427343
    %v159 = vsel %vm158, %v156, %v153
    %v160 = vadd.f32 %v145, %v159
    %v161 = vsub.f32 1.0, %v27
    %v162 = vsub.f32 %v135, %v160
    %164 = vrot.lane.b32.xlu0 %v162, 62
    %v165 = vpop.permute.xlu0 %164
    %v167 = vmul.f32 %v161, %v165
    %169 = vrot.lane.b32.xlu0 %v160, 1
    %v170 = vpop.permute.xlu0 %169
    %v172 = vsub.f32 %v140, %v170
    %174 = vrot.lane.b32.xlu0 %v172, 61
    %v175 = vpop.permute.xlu0 %174
    %v177 = vmul.f32 %v27, %v175
    %v178 = vadd.f32 %v167, %v177
    %v179 = vsub.f32 0.0, %v178
    %181 = vrot.lane.b32.xlu0 %v27, 127
    %v182 = vpop.permute.xlu0 %181
    %v184 = vmul.f32 %v179, %v182
    %186 = vrot.lane.b32.xlu0 %v184, 64
    %v187 = vpop.permute.xlu0 %186
    %vm189 = vcmask 7168
    %v190 = vsel %vm189, %v187, 0.0
    %191 = vadd.xlane.f32.xlu0 %v190
    %v192 = vpop.xlane.xlu0 %191
    %v193 = vrot.slane %v192, 4
    %v194 = vadd.f32 %v192, %v193
    %v195 = vrot.slane %v194, 2
    %v196 = vadd.f32 %v194, %v195
    %v197 = vrot.slane %v196, 1
    %v198 = vadd.f32 %v196, %v197
    %s199 = vtos %v198
    %200 = vrot.lane.b32.xlu0 %v27, 63
    %v201 = vpop.permute.xlu0 %200
    %v203 = vsel %vm189, %v201, 0.0
    %204 = vadd.xlane.f32.xlu0 %v203
    %v205 = vpop.xlane.xlu0 %204
    %v206 = vrot.slane %v205, 4
    %v207 = vadd.f32 %v205, %v206
    %v208 = vrot.slane %v207, 2
    %v209 = vadd.f32 %v207, %v208
    %v210 = vrot.slane %v209, 1
    %v211 = vadd.f32 %v209, %v210
    %s212 = vtos %v211
    %v213 = vlaneseq
    %v214 = vand.u32 %v213, 127
    %vm215 = vcmp.eq.s32.totalorder %v214, 0
    %vm216 = vcmp.eq.s32.totalorder %v214, 1
    %vm217 = vcmp.eq.s32.totalorder %v214, 2
    %vm218 = vcmp.eq.s32.totalorder %v214, 3
    %v219 = vstv %s212
    %v220 = vsel %vm218, %v219, 0.0
    %v221 = vstv %s199
    %v222 = vsel %vm217, %v221, %v220
    %223 = vset.pattern.permute.xlu0 3
    %224 = vperm.xlu0 %223, %v140
    %v225 = vpop.permute.xlu0 %224
    %v227 = vsel %vm216, %v225, %v222
    %229 = vset.pattern.permute.xlu0 2
    %230 = vperm.xlu0 %229, %v135
    %v231 = vpop.permute.xlu0 %230
    %v233 = vsel %vm215, %v231, %v227
    %234 = vst [vmem:[%s2] sm:$0xff] %v233
    // Predicated region
    $region14: #{poe_head.1} parent=1 // pred_check
      _
    $region15: #{poe_head.1} parent=1 // pred_check_branch
      %236 = sbr.rel (0) target = $region17
    $region16: #{poe_head.1} parent=1 // pred_region
      _
    $region17: #{poe_head.1} parent=1 // pred_fallthru
      _
    // Predicated region
    $region18: #{poe_head.1} parent=1 // pred_check
      _
    $region19: #{poe_head.1} parent=1 // pred_check_branch
      %238 = sbr.rel (0) target = $region21
    $region20: #{poe_head.1} parent=1 // pred_region
      _
    $region21: #{poe_head.1} parent=1 // pred_fallthru
      _
    %239 = vsyncpa [#allocation3], 1

</llo_original>
